<compile_context>
chip_gen: v7x
topology: tpu7x:2x2x1
jax: 0.10.0
libtpu: 0.0.40
codegen_flags: <defaults>
</compile_context>

<pallas_src>
import functools

import numpy as np
import jax
import jax.numpy as jnp
from jax import lax
from jax.experimental import pallas as pl
from jax.experimental.pallas import tpu as pltpu


def _triplet_loss_kernel(emb_ref, sq_ref, lab_ref, out_ref, *,
                         margin, negative_policy, positive_policy,
                         n_real, tm):
    """One grid step = TM anchor rows mined against all Npad columns."""
    i = pl.program_id(0)
    row0 = pl.multiple_of(i * tm, tm)

    e_all = emb_ref[...]                               # (Npad, Dpad) f32, resident
    npad = e_all.shape[0]
    e = emb_ref[pl.ds(row0, tm), :]                    # (TM, Dpad) anchor tile (VMEM slice)
    sq_r = sq_ref[...]                                 # (1, Npad)  f32  squared row norms
    lab_r = lab_ref[...]                               # (1, Npad)  int32 labels

    marg = jnp.float32(margin)
    big = jnp.float32(3.0e38)

    # Squared Euclidean distances via MXU gram matrix; the transpose is folded
    # into the dot_general dimension numbers (contract D of both operands).
    sq_c = jnp.sum(e * e, axis=1, keepdims=True)       # (TM, 1)
    gram = lax.dot_general(e, e_all, (((1,), (1,)), ((), ())),
                           preferred_element_type=jnp.float32)   # (TM, Npad)
    dist = jnp.maximum(sq_c + sq_r - 2.0 * gram, 0.0)

    # Global row/col indices of this tile -- mining math stays in int32.
    row_gid = row0 + lax.broadcasted_iota(jnp.int32, (tm, npad), 0)
    col_gid = lax.broadcasted_iota(jnp.int32, (tm, npad), 1)
    diag = row_gid == col_gid
    dist = jnp.where(diag, 0.0, dist)                  # exact self-distance zeros

    # Anchor labels for this tile, extracted from the single (1, Npad) label row
    # (exactly one diagonal hit per row -> masked sum == gather, no transpose).
    lab_a = jnp.sum(jnp.where(diag, lab_r, 0), axis=1, keepdims=True)   # (TM, 1) i32

    col_ok = col_gid < n_real                          # mask padded columns
    anchor_ok = (row0 + lax.broadcasted_iota(jnp.int32, (tm, 1), 0)) < n_real

    same = (lab_a == lab_r) & col_ok
    negm = (lab_a != lab_r) & col_ok

    class_cnt = jnp.sum(same.astype(jnp.int32), axis=1, keepdims=True)  # incl. self
    pos = same & (dist > 0.0)                          # positives after nonzero() filter
    has_pos = jnp.sum(pos.astype(jnp.int32), axis=1, keepdims=True) > 0

    if positive_policy == 'easy':
        dist_ap = jnp.min(jnp.where(pos, dist, big), axis=1, keepdims=True)
    else:
        dist_ap = jnp.max(jnp.where(pos, dist, -big), axis=1, keepdims=True)

    dist_an_min = jnp.min(jnp.where(negm, dist, big), axis=1, keepdims=True)

    if negative_policy == 'semi-hard':
        cond = negm & (dist > dist_ap) & (dist < dist_ap + marg)
    else:
        cond = negm & (dist < dist_ap)

    n_cond = jnp.sum(cond.astype(jnp.int32), axis=1, keepdims=True)
    # First qualifying negative's global column index ...
    first_j = jnp.min(jnp.where(cond, col_gid, jnp.int32(npad)),
                      axis=1, keepdims=True)
    # ... and its position m within the ascending negative-index list.  Quirk
    # preserved from the reference: dist_mat[a, mined_indices[0, 0]] uses that
    # position m itself as a raw column index into the distance row.
    m = jnp.sum((negm & (col_gid < first_j)).astype(jnp.int32),
                axis=1, keepdims=True)
    dist_an_mined = jnp.sum(jnp.where(col_gid == m, dist, 0.0),
                            axis=1, keepdims=True)

    dist_an = jnp.where(n_cond > 0, dist_an_mined, dist_an_min)

    # Valid anchor: not padding, class has >= 2 members, and at least one
    # strictly-positive positive distance (reference would crash otherwise).
    valid = anchor_ok & (class_cnt >= 2) & has_pos
    loss = jnp.where(valid, jnp.maximum(dist_ap - dist_an + marg, 0.0), 0.0)

    tile_loss = jnp.sum(loss)
    tile_cnt = jnp.sum(jnp.where(valid, 1.0, 0.0))

    # Lane-dense (1, 1, 128) partial output: lane 0 = loss sum, lane 1 = count.
    lane = lax.broadcasted_iota(jnp.int32, (1, 1, 128), 2)
    out_ref[...] = jnp.where(lane == 0, tile_loss,
                             jnp.where(lane == 1, tile_cnt, 0.0))


def _choose_tiles(n, d):
    """Pick anchor-row tile TM and padded shapes; keep VMEM well under v7x's 64 MiB."""
    dpad = -(-d // 128) * 128
    n8 = -(-n // 8) * 8
    budget = 36 * 1024 * 1024
    for tm in (256, 128, 64, 32, 16, 8):
        if tm > n8:
            continue
        npad = -(-n // tm) * tm
        # resident embeddings + row tile + ~12 live (TM, Npad) f32/i32 temporaries
        est = 4 * (npad * dpad + tm * dpad + 12 * tm * npad + 4 * npad) + (1 << 16)
        if est <= budget:
            return tm, npad, dpad
    # TODO(synk): tile the column axis too for N large enough that (Npad, Dpad)
    # embeddings + (8, Npad) working tiles no longer fit resident in VMEM.
    return 8, -(-n // 8) * 8, dpad


def triplet_loss_pallas(embeddings, labels, margin=0.2,
                        negative_policy='semi-hard', positive_policy='easy'):
    emb = jnp.asarray(embeddings, jnp.float32)
    n, d = emb.shape
    tm, npad, dpad = _choose_tiles(n, d)
    grid = npad // tm

    # Zero-pad: extra feature columns don't change squared distances; padded
    # rows/cols are masked inside the kernel via n_real.
    emb_p = jnp.pad(emb, ((0, npad - n), (0, dpad - d)))
    lab_p = jnp.pad(jnp.asarray(labels, jnp.int32).reshape(1, n),
                    ((0, 0), (0, npad - n)))
    sq_p = jnp.sum(emb_p * emb_p, axis=1).reshape(1, npad)   # computed once, reused by every tile

    kernel = functools.partial(
        _triplet_loss_kernel, margin=float(margin),
        negative_policy=negative_policy, positive_policy=positive_policy,
        n_real=n, tm=tm)

    out = pl.pallas_call(
        kernel,
        out_shape=jax.ShapeDtypeStruct((grid, 1, 128), jnp.float32),
        grid=(grid,),
        in_specs=[
            pl.BlockSpec((npad, dpad), lambda i: (0, 0)),   # embeddings, resident
            pl.BlockSpec((1, npad), lambda i: (0, 0)),      # squared row norms, resident
            pl.BlockSpec((1, npad), lambda i: (0, 0)),      # labels, resident
        ],
        out_specs=pl.BlockSpec((1, 1, 128), lambda i: (i, 0, 0)),
        compiler_params=pltpu.CompilerParams(
            dimension_semantics=("parallel",),
            vmem_limit_bytes=48 * 1024 * 1024),
    )(emb_p, sq_p, lab_p)

    total = jnp.sum(out[:, 0, 0])
    count = jnp.sum(out[:, 0, 1])
    # Precondition (same as the PyTorch reference): at least one class has >= 2
    # members; otherwise count == 0 and the reference divides by zero as well.
    return total / count


def triplet_loss_ref(emb, labels, margin=0.2,
                     negative_policy='semi-hard', positive_policy='easy'):
    """NumPy re-implementation faithful to the PyTorch reference (incl. quirk)."""
    emb = np.asarray(emb, np.float32)
    labels = np.asarray(labels)
    sq = (emb * emb).sum(-1)
    dist = np.maximum(sq[:, None] + sq[None, :] - 2.0 * emb @ emb.T, 0.0)
    np.fill_diagonal(dist, 0.0)
    total, count = 0.0, 0
    for c in np.unique(labels):
        ap = np.nonzero(labels == c)[0]
        if len(ap) < 2:
            continue
        nn_ = np.nonzero(labels != c)[0]
        for a in ap:
            d_an = dist[a, nn_]
            d_ap = dist[a, ap]
            d_ap = d_ap[d_ap != 0]
            dap = d_ap.min() if positive_policy == 'easy' else d_ap.max()
            if negative_policy == 'semi-hard':
                mined = np.nonzero((d_an > dap) & (d_an < dap + margin))[0]
            else:
                mined = np.nonzero(d_an < dap)[0]
            if mined.size == 0:
                dan = d_an.min()
            else:
                dan = dist[a, mined[0]]   # quirk: raw position used as column index
            total += max(dap - dan + margin, 0.0)
            count += 1
    return total / count


if __name__ == "__main__":
    key = jax.random.PRNGKey(0)
    k1, k2 = jax.random.split(key)

    # Test 1: original shipped size (single row tile).
    N, D = 16, 32
    emb1 = jax.random.normal(k1, (N, D), dtype=jnp.float32)
    lab1 = jnp.array([0, 0, 0, 0, 1, 1, 1, 1, 2, 2, 2, 2, 3, 3, 3, 3], jnp.int32)
    out1 = jax.block_until_ready(triplet_loss_pallas(emb1, lab1, margin=0.2))
    ref1 = triplet_loss_ref(np.asarray(emb1), np.asarray(lab1), margin=0.2)
    assert abs(float(out1) - ref1) < 2e-3 * max(1.0, abs(ref1)), (float(out1), ref1)

    # Test 2: multi-tile grid + row/col padding + a singleton class (skipped).
    N2, D2 = 40, 32
    emb2 = jax.random.normal(k2, (N2, D2), dtype=jnp.float32)
    lab2 = jnp.array([i % 6 for i in range(N2 - 1)] + [99], jnp.int32)
    out2 = jax.block_until_ready(triplet_loss_pallas(emb2, lab2, margin=0.2))
    ref2 = triplet_loss_ref(np.asarray(emb2), np.asarray(lab2), margin=0.2)
    assert abs(float(out2) - ref2) < 2e-3 * max(1.0, abs(ref2)), (float(out2), ref2)

    # Test 3: 'hard' positive/negative policies.
    out3 = jax.block_until_ready(
        triplet_loss_pallas(emb1, lab1, margin=0.2,
                            negative_policy='hard', positive_policy='hard'))
    ref3 = triplet_loss_ref(np.asarray(emb1), np.asarray(lab1), margin=0.2,
                            negative_policy='hard', positive_policy='hard')
    assert abs(float(out3) - ref3) < 2e-3 * max(1.0, abs(ref3)), (float(out3), ref3)

    print("KERNEL_OK")
</pallas_src>

<mosaic_0001>
module attributes {stable_mosaic.version = 11 : i64} {
  func.func @_triplet_loss_kernel(%arg0: i32, %arg1: memref<16x128xf32, #tpu.memory_space<vmem>>, %arg2: memref<1x16xf32, #tpu.memory_space<vmem>>, %arg3: memref<1x16xi32, #tpu.memory_space<vmem>>, %arg4: memref<1x1x128xf32, #tpu.memory_space<vmem>>) attributes {dimension_semantics = [#tpu.dimension_semantics<parallel>], iteration_bounds = array<i64: 1>, scalar_prefetch = 0 : i64, scratch_operands = 0 : i64, tpu.core_type = #tpu.core_type<tc>, window_params = [{pipeline_mode = #tpu.pipeline_mode<synchronous>, transform_indices = @transform_0, window_bounds = array<i64: 16, 128>}, {pipeline_mode = #tpu.pipeline_mode<synchronous>, transform_indices = @transform_1, window_bounds = array<i64: 1, 16>}, {pipeline_mode = #tpu.pipeline_mode<synchronous>, transform_indices = @transform_2, window_bounds = array<i64: 1, 16>}, {transform_indices = @transform_3, window_bounds = array<i64: 1, 1, 128>}]} {
    %c16_i32 = arith.constant 16 : i32
    %0 = arith.muli %arg0, %c16_i32 : i32
    %1 = tpu.assume_multiple %0, 16 : i32
    %c0 = arith.constant 0 : index
    %c0_0 = arith.constant 0 : index
    %2 = vector.load %arg1[%c0, %c0_0] : memref<16x128xf32, #tpu.memory_space<vmem>>, vector<16x128xf32>
    %3 = arith.index_cast %1 : i32 to index
    %c0_1 = arith.constant 0 : index
    %4 = vector.load %arg1[%3, %c0_1] : memref<16x128xf32, #tpu.memory_space<vmem>>, vector<16x128xf32>
    %c0_2 = arith.constant 0 : index
    %c0_3 = arith.constant 0 : index
    %5 = vector.load %arg2[%c0_2, %c0_3] : memref<1x16xf32, #tpu.memory_space<vmem>>, vector<1x16xf32>
    %c0_4 = arith.constant 0 : index
    %c0_5 = arith.constant 0 : index
    %6 = vector.load %arg3[%c0_4, %c0_5] : memref<1x16xi32, #tpu.memory_space<vmem>>, vector<1x16xi32>
    %7 = arith.mulf %4, %4 : vector<16x128xf32>
    %cst = arith.constant dense<0.000000e+00> : vector<16xf32>
    %8 = vector.multi_reduction <add>, %7, %cst [1] : vector<16x128xf32> to vector<16xf32>
    %9 = vector.shape_cast %8 : vector<16xf32> to vector<16x1xf32>
    %cst_6 = arith.constant dense<0.000000e+00> : vector<16x16xf32>
    %10 = tpu.matmul %4, %2, %cst_6 {dimension_numbers = #tpu.dot_dimension_numbers<[1], [1], [0], [0], [0, 0, 1, 0], [], []>} : vector<16x128xf32>, vector<16x128xf32>, vector<16x16xf32> -> vector<16x16xf32>
    %11 = vector.broadcast %9 : vector<16x1xf32> to vector<16x16xf32>
    %12 = vector.broadcast %5 : vector<1x16xf32> to vector<16x16xf32>
    %13 = arith.addf %11, %12 : vector<16x16xf32>
    %cst_7 = arith.constant 2.000000e+00 : f32
    %14 = vector.broadcast %cst_7 : f32 to vector<16x16xf32>
    %15 = arith.mulf %14, %10 : vector<16x16xf32>
    %16 = arith.subf %13, %15 : vector<16x16xf32>
    %cst_8 = arith.constant 0.000000e+00 : f32
    %17 = vector.broadcast %cst_8 : f32 to vector<16x16xf32>
    %18 = arith.maximumf %16, %17 : vector<16x16xf32>
    %19 = tpu.iota {dimensions = array<i32: 0>} : vector<16x16xi32>
    %20 = vector.broadcast %1 : i32 to vector<16x16xi32>
    %21 = arith.addi %20, %19 : vector<16x16xi32>
    %22 = tpu.iota {dimensions = array<i32: 1>} : vector<16x16xi32>
    %23 = arith.cmpi eq, %21, %22 : vector<16x16xi32>
    %cst_9 = arith.constant 0.000000e+00 : f32
    %24 = vector.broadcast %cst_9 : f32 to vector<16x16xf32>
    %25 = arith.select %23, %24, %18 : vector<16x16xi1>, vector<16x16xf32>
    %c0_i32 = arith.constant 0 : i32
    %26 = vector.shape_cast %6 : vector<1x16xi32> to vector<1x16xi32>
    %27 = vector.broadcast %26 : vector<1x16xi32> to vector<16x16xi32>
    %28 = vector.broadcast %c0_i32 : i32 to vector<16x16xi32>
    %29 = arith.select %23, %27, %28 : vector<16x16xi1>, vector<16x16xi32>
    %cst_10 = arith.constant dense<0> : vector<16xi32>
    %30 = vector.multi_reduction <add>, %29, %cst_10 [1] : vector<16x16xi32> to vector<16xi32>
    %31 = vector.shape_cast %30 : vector<16xi32> to vector<16x1xi32>
    %c16_i32_11 = arith.constant 16 : i32
    %32 = vector.broadcast %c16_i32_11 : i32 to vector<16x16xi32>
    %33 = arith.cmpi slt, %22, %32 : vector<16x16xi32>
    %34 = tpu.iota {dimensions = array<i32: 0>} : vector<16x1xi32>
    %35 = vector.broadcast %1 : i32 to vector<16x1xi32>
    %36 = arith.addi %35, %34 : vector<16x1xi32>
    %c16_i32_12 = arith.constant 16 : i32
    %37 = vector.broadcast %c16_i32_12 : i32 to vector<16x1xi32>
    %38 = arith.cmpi slt, %36, %37 : vector<16x1xi32>
    %39 = vector.broadcast %31 : vector<16x1xi32> to vector<16x16xi32>
    %40 = vector.broadcast %6 : vector<1x16xi32> to vector<16x16xi32>
    %41 = arith.cmpi eq, %39, %40 : vector<16x16xi32>
    %42 = arith.andi %41, %33 : vector<16x16xi1>
    %43 = vector.broadcast %31 : vector<16x1xi32> to vector<16x16xi32>
    %44 = vector.broadcast %6 : vector<1x16xi32> to vector<16x16xi32>
    %45 = arith.cmpi ne, %43, %44 : vector<16x16xi32>
    %46 = arith.andi %45, %33 : vector<16x16xi1>
    %47 = arith.extui %42 : vector<16x16xi1> to vector<16x16xi32>
    %cst_13 = arith.constant dense<0> : vector<16xi32>
    %48 = vector.multi_reduction <add>, %47, %cst_13 [1] : vector<16x16xi32> to vector<16xi32>
    %49 = vector.shape_cast %48 : vector<16xi32> to vector<16x1xi32>
    %cst_14 = arith.constant 0.000000e+00 : f32
    %50 = vector.broadcast %cst_14 : f32 to vector<16x16xf32>
    %51 = arith.cmpf ogt, %25, %50 : vector<16x16xf32>
    %52 = arith.andi %42, %51 : vector<16x16xi1>
    %53 = arith.extui %52 : vector<16x16xi1> to vector<16x16xi32>
    %cst_15 = arith.constant dense<0> : vector<16xi32>
    %54 = vector.multi_reduction <add>, %53, %cst_15 [1] : vector<16x16xi32> to vector<16xi32>
    %55 = vector.shape_cast %54 : vector<16xi32> to vector<16x1xi32>
    %c0_i32_16 = arith.constant 0 : i32
    %56 = vector.broadcast %c0_i32_16 : i32 to vector<16x1xi32>
    %57 = arith.cmpi sgt, %55, %56 : vector<16x1xi32>
    %cst_17 = arith.constant 3.000000e+38 : f32
    %58 = vector.broadcast %cst_17 : f32 to vector<16x16xf32>
    %59 = arith.select %52, %25, %58 : vector<16x16xi1>, vector<16x16xf32>
    %cst_18 = arith.constant dense<0x7F800000> : vector<16xf32>
    %60 = vector.multi_reduction <minimumf>, %59, %cst_18 [1] : vector<16x16xf32> to vector<16xf32>
    %61 = vector.shape_cast %60 : vector<16xf32> to vector<16x1xf32>
    %cst_19 = arith.constant 3.000000e+38 : f32
    %62 = vector.broadcast %cst_19 : f32 to vector<16x16xf32>
    %63 = arith.select %46, %25, %62 : vector<16x16xi1>, vector<16x16xf32>
    %cst_20 = arith.constant dense<0x7F800000> : vector<16xf32>
    %64 = vector.multi_reduction <minimumf>, %63, %cst_20 [1] : vector<16x16xf32> to vector<16xf32>
    %65 = vector.shape_cast %64 : vector<16xf32> to vector<16x1xf32>
    %66 = vector.broadcast %61 : vector<16x1xf32> to vector<16x16xf32>
    %67 = arith.cmpf ogt, %25, %66 : vector<16x16xf32>
    %68 = arith.andi %46, %67 : vector<16x16xi1>
    %cst_21 = arith.constant 2.000000e-01 : f32
    %69 = vector.broadcast %cst_21 : f32 to vector<16x1xf32>
    %70 = arith.addf %61, %69 : vector<16x1xf32>
    %71 = vector.broadcast %70 : vector<16x1xf32> to vector<16x16xf32>
    %72 = arith.cmpf olt, %25, %71 : vector<16x16xf32>
    %73 = arith.andi %68, %72 : vector<16x16xi1>
    %74 = arith.extui %73 : vector<16x16xi1> to vector<16x16xi32>
    %cst_22 = arith.constant dense<0> : vector<16xi32>
    %75 = vector.multi_reduction <add>, %74, %cst_22 [1] : vector<16x16xi32> to vector<16xi32>
    %76 = vector.shape_cast %75 : vector<16xi32> to vector<16x1xi32>
    %c16_i32_23 = arith.constant 16 : i32
    %77 = vector.broadcast %c16_i32_23 : i32 to vector<16x16xi32>
    %78 = arith.select %73, %22, %77 : vector<16x16xi1>, vector<16x16xi32>
    %cst_24 = arith.constant dense<2147483647> : vector<16xi32>
    %79 = vector.multi_reduction <minsi>, %78, %cst_24 [1] : vector<16x16xi32> to vector<16xi32>
    %80 = vector.shape_cast %79 : vector<16xi32> to vector<16x1xi32>
    %81 = vector.broadcast %80 : vector<16x1xi32> to vector<16x16xi32>
    %82 = arith.cmpi slt, %22, %81 : vector<16x16xi32>
    %83 = arith.andi %46, %82 : vector<16x16xi1>
    %84 = arith.extui %83 : vector<16x16xi1> to vector<16x16xi32>
    %cst_25 = arith.constant dense<0> : vector<16xi32>
    %85 = vector.multi_reduction <add>, %84, %cst_25 [1] : vector<16x16xi32> to vector<16xi32>
    %86 = vector.shape_cast %85 : vector<16xi32> to vector<16x1xi32>
    %87 = vector.broadcast %86 : vector<16x1xi32> to vector<16x16xi32>
    %88 = arith.cmpi eq, %22, %87 : vector<16x16xi32>
    %cst_26 = arith.constant 0.000000e+00 : f32
    %89 = vector.broadcast %cst_26 : f32 to vector<16x16xf32>
    %90 = arith.select %88, %25, %89 : vector<16x16xi1>, vector<16x16xf32>
    %cst_27 = arith.constant dense<0.000000e+00> : vector<16xf32>
    %91 = vector.multi_reduction <add>, %90, %cst_27 [1] : vector<16x16xf32> to vector<16xf32>
    %92 = vector.shape_cast %91 : vector<16xf32> to vector<16x1xf32>
    %c0_i32_28 = arith.constant 0 : i32
    %93 = vector.broadcast %c0_i32_28 : i32 to vector<16x1xi32>
    %94 = arith.cmpi sgt, %76, %93 : vector<16x1xi32>
    %95 = arith.select %94, %92, %65 : vector<16x1xi1>, vector<16x1xf32>
    %c2_i32 = arith.constant 2 : i32
    %96 = vector.broadcast %c2_i32 : i32 to vector<16x1xi32>
    %97 = arith.cmpi sge, %49, %96 : vector<16x1xi32>
    %98 = arith.andi %38, %97 : vector<16x1xi1>
    %99 = arith.andi %98, %57 : vector<16x1xi1>
    %100 = arith.subf %61, %95 : vector<16x1xf32>
    %cst_29 = arith.constant 2.000000e-01 : f32
    %101 = vector.broadcast %cst_29 : f32 to vector<16x1xf32>
    %102 = arith.addf %100, %101 : vector<16x1xf32>
    %cst_30 = arith.constant 0.000000e+00 : f32
    %103 = vector.broadcast %cst_30 : f32 to vector<16x1xf32>
    %104 = arith.maximumf %102, %103 : vector<16x1xf32>
    %cst_31 = arith.constant 0.000000e+00 : f32
    %105 = vector.broadcast %cst_31 : f32 to vector<16x1xf32>
    %106 = arith.select %99, %104, %105 : vector<16x1xi1>, vector<16x1xf32>
    %107 = vector.shape_cast %106 : vector<16x1xf32> to vector<1x16x1xf32>
    %cst_32 = arith.constant dense<0.000000e+00> : vector<1xf32>
    %108 = vector.multi_reduction <add>, %107, %cst_32 [1, 2] : vector<1x16x1xf32> to vector<1xf32>
    %109 = vector.shape_cast %108 : vector<1xf32> to vector<1x1x1xf32>
    %110 = vector.extract %109[0, 0, 0] : f32 from vector<1x1x1xf32>
    %cst_33 = arith.constant 1.000000e+00 : f32
    %cst_34 = arith.constant 0.000000e+00 : f32
    %111 = vector.broadcast %cst_33 : f32 to vector<16x1xf32>
    %112 = vector.broadcast %cst_34 : f32 to vector<16x1xf32>
    %113 = arith.select %99, %111, %112 : vector<16x1xi1>, vector<16x1xf32>
    %114 = vector.shape_cast %113 : vector<16x1xf32> to vector<1x16x1xf32>
    %cst_35 = arith.constant dense<0.000000e+00> : vector<1xf32>
    %115 = vector.multi_reduction <add>, %114, %cst_35 [1, 2] : vector<1x16x1xf32> to vector<1xf32>
    %116 = vector.shape_cast %115 : vector<1xf32> to vector<1x1x1xf32>
    %117 = vector.extract %116[0, 0, 0] : f32 from vector<1x1x1xf32>
    %118 = tpu.iota {dimensions = array<i32: 2>} : vector<1x1x128xi32>
    %c0_i32_36 = arith.constant 0 : i32
    %119 = vector.broadcast %c0_i32_36 : i32 to vector<1x1x128xi32>
    %120 = arith.cmpi eq, %118, %119 : vector<1x1x128xi32>
    %c1_i32 = arith.constant 1 : i32
    %121 = vector.broadcast %c1_i32 : i32 to vector<1x1x128xi32>
    %122 = arith.cmpi eq, %118, %121 : vector<1x1x128xi32>
    %cst_37 = arith.constant 0.000000e+00 : f32
    %123 = vector.broadcast %117 : f32 to vector<1x1x128xf32>
    %124 = vector.broadcast %cst_37 : f32 to vector<1x1x128xf32>
    %125 = arith.select %122, %123, %124 : vector<1x1x128xi1>, vector<1x1x128xf32>
    %126 = vector.broadcast %110 : f32 to vector<1x1x128xf32>
    %127 = arith.select %120, %126, %125 : vector<1x1x128xi1>, vector<1x1x128xf32>
    %c0_38 = arith.constant 0 : index
    %c0_39 = arith.constant 0 : index
    %c0_40 = arith.constant 0 : index
    %128 = vector.load %arg4[%c0_38, %c0_39, %c0_40] : memref<1x1x128xf32, #tpu.memory_space<vmem>>, vector<1x1x128xf32>
    tpu.vector_store %arg4[%c0_38, %c0_39, %c0_40], %127 {strides = array<i32>} : memref<1x1x128xf32, #tpu.memory_space<vmem>>, vector<1x1x128xf32>,
    return
  }
  func.func @transform_0(%arg0: i32) -> (i32, i32) {
    %c0_i32 = arith.constant 0 : i32
    %c0_i32_0 = arith.constant 0 : i32
    %c0_i32_1 = arith.constant 0 : i32
    return %c0_i32, %c0_i32_0 : i32, i32
  }
  func.func @transform_1(%arg0: i32) -> (i32, i32) {
    %c0_i32 = arith.constant 0 : i32
    %c0_i32_0 = arith.constant 0 : i32
    %c0_i32_1 = arith.constant 0 : i32
    return %c0_i32, %c0_i32_0 : i32, i32
  }
  func.func @transform_2(%arg0: i32) -> (i32, i32) {
    %c0_i32 = arith.constant 0 : i32
    %c0_i32_0 = arith.constant 0 : i32
    %c0_i32_1 = arith.constant 0 : i32
    return %c0_i32, %c0_i32_0 : i32, i32
  }
  func.func @transform_3(%arg0: i32) -> (i32, i32, i32) {
    %c0_i32 = arith.constant 0 : i32
    %c0_i32_0 = arith.constant 0 : i32
    %c0_i32_1 = arith.constant 0 : i32
    return %arg0, %c0_i32, %c0_i32_0 : i32, i32, i32
  }
}

</mosaic_0001>

<llo_original>
// kernel: tpu_custom_call.1
$region0: #{tpu_custom_call.1}
  #allocation0 [shape = 'u32[]', space=smem, size = 0x4, offset = 0x4, fixed_abs, tag = 'smem constant byte address 0x4 - core index']
  #allocation1 [shape = 'u32[144,128]{1,0:T(1,128)}', space=vmem, size = 0x12000, scoped, tag = 'internal scratch']
  %s0 = inlined_call_operand.hbm [shape: f32[16,128], index: 0, kind: input, shape index: {}]
  %s1 = inlined_call_operand.vmem [shape: f32[1,16], index: 1, kind: input, shape index: {}]
  %s2 = inlined_call_operand.vmem [shape: s32[1,16], index: 2, kind: input, shape index: {}]
  %s3 = inlined_call_operand.hbm [shape: f32[1,1,128], index: 3, kind: output, shape index: {}]
  %s4 = sld [smem:[#allocation0]]
  $region26: #{tpu_custom_call.1} parent=0
    _
  %s6 = ssub.s32 1, %s4
  %s7 = scalar_select 0, %s6, %s4
  $region1: #{tpu_custom_call.1} parent=0
    #allocation2 [shape = 'u8[8192]{0}', space=vmem, size = 0x2000, scoped, tag = 'input window, operand 0, single buffered']
    #allocation3 [shape = 's32[1]{0}', space=sflag, size = 0x4, scoped, tag = 'scoped memory for tpu_custom_call.1']
    #allocation4 [shape = 's32[1]{0}', space=sflag, size = 0x4, scoped, tag = 'scoped memory for tpu_custom_call.1']
    #allocation5 [shape = 'u8[512]{0}', space=vmem, size = 0x400, scoped, tag = 'output window, operand 0, single buffered']
    %8 = vsyncpa [#allocation3], 0
    %9 = vsyncpa [#allocation4], 0
    // Predicated region
    $region2: #{tpu_custom_call.1} parent=1 // pred_check
      _
    $region3: #{tpu_custom_call.1} parent=1 // pred_check_branch
      %11 = sbr.rel (0) target = $region5
    $region4: #{tpu_custom_call.1} parent=1 // pred_region
      %s13 = ssub.s32 256, 256
      %14 = vsyncadd [#allocation3], %s13
      %s15 = sshll.u32 [#allocation2], 4
      %s16 = int_to_ptr.vmem [resolvable:$true] %s15
      %21 = dma.hbm_to_vmem [thread:$0]  %s0, 256, %s16, [#allocation3], 128, 128, 8
    $region5: #{tpu_custom_call.1} parent=1 // pred_fallthru
      _
    // Predicated region
    $region6: #{tpu_custom_call.1} parent=1 // pred_check
      _
    $region7: #{tpu_custom_call.1} parent=1 // pred_check_branch
      %23 = sbr.rel (0) target = $region9
    $region8: #{tpu_custom_call.1} parent=1 // pred_region
      _
    $region9: #{tpu_custom_call.1} parent=1 // pred_fallthru
      _
    // Predicated region
    $region10: #{tpu_custom_call.1} parent=1 // pred_check
      _
    $region11: #{tpu_custom_call.1} parent=1 // pred_check_branch
      %25 = sbr.rel (0) target = $region13
    $region12: #{tpu_custom_call.1} parent=1 // pred_region
      _
    $region13: #{tpu_custom_call.1} parent=1 // pred_fallthru
      _
    // Predicated region
    $region14: #{tpu_custom_call.1} parent=1 // pred_check
      _
    $region15: #{tpu_custom_call.1} parent=1 // pred_check_branch
      %27 = sbr.rel (0) target = $region17
    $region16: #{tpu_custom_call.1} parent=1 // pred_region
      %28 = dma.done [#allocation3], 256
    $region17: #{tpu_custom_call.1} parent=1 // pred_fallthru
      _
    %s29 = smul.u32 0, 16
    %v30 = vld [vmem:[#allocation2] sm:$0xff]
    %v31 = vld [vmem:[#allocation2 + $0x8] sm:$0xff]
    %s32 = scalar_lea.vmem [#allocation2], %s29
    %v33 = vld [vmem:[%s32] sm:$0xff]
    %v34 = vld [vmem:[%s32 + $0x8] sm:$0xff]
    %v35 = vld [vmem:[%s1] sm:$0x1]
    %v36 = vld [vmem:[%s2] sm:$0x1]
    %v37 = vmul.f32 %v33, %v33
    %v38 = vmul.f32 %v34, %v34
    %39 = vadd.xlane.f32.xlu0 %v37
    %v40 = vpop.xlane.xlu0 %39
    %41 = vadd.xlane.f32.xlu0 %v38
    %v42 = vpop.xlane.xlu0 %41
    %43 = vmatprep.subr.mxu0 0.0
    %44 = vmatpush1.xpose.msra.mxu0 %v30
    %45 = vmatprep.subr.mxu0 0.0
    %46 = vmatpush1.xpose.msra.mxu0 %v31
    %47 = vmatprep.subr.mxu0 0.0
    %48 = vmatpush1.xpose.msra.mxu0 0.0
    %49 = vmatprep.subr.mxu0 0.0
    %50 = vmatpush1.xpose.msra.mxu0 0.0
    %51 = vmatprep.subr.mxu0 0.0
    %52 = vmatpush1.xpose.msra.mxu0 0.0
    %53 = vmatprep.subr.mxu0 0.0
    %54 = vmatpush1.xpose.msra.mxu0 0.0
    %55 = vmatprep.subr.mxu0 0.0
    %56 = vmatpush1.xpose.msra.mxu0 0.0
    %57 = vmatprep.subr.mxu0 0.0
    %58 = vmatpush1.xpose.msra.mxu0 0.0
    %59 = vmatprep.subr.mxu0 0.0
    %60 = vmatpush1.xpose.msra.mxu0 0.0
    %61 = vmatprep.subr.mxu0 0.0
    %62 = vmatpush1.xpose.msra.mxu0 0.0
    %63 = vmatprep.subr.mxu0 0.0
    %64 = vmatpush1.xpose.msra.mxu0 0.0
    %65 = vmatprep.subr.mxu0 0.0
    %66 = vmatpush1.xpose.msra.mxu0 0.0
    %67 = vmatprep.subr.mxu0 0.0
    %68 = vmatpush1.xpose.msra.mxu0 0.0
    %69 = vmatprep.subr.mxu0 0.0
    %70 = vmatpush1.xpose.msra.mxu0 0.0
    %71 = vmatprep.subr.mxu0 0.0
    %72 = vmatpush1.xpose.msra.mxu0 0.0
    %73 = vmatprep.subr.mxu0 0.0
    %74 = vmatpush1.xpose.msra.mxu0 0.0
    %75 = vmatprep.subr.mxu0 0.0
    %76 = vmatpush1.xpose.msra.mxu0 0.0
    %77 = vmatprep.subr.mxu0 0.0
    %78 = vmatpush1.xpose.msra.mxu0 0.0
    %79 = vmatprep.subr.mxu0 0.0
    %80 = vmatpush1.xpose.msra.mxu0 0.0
    %81 = vmatprep.subr.mxu0 0.0
    %82 = vmatpush1.xpose.msra.mxu0 0.0
    %83 = vmatprep.subr.mxu0 0.0
    %84 = vmatpush1.xpose.msra.mxu0 0.0
    %85 = vmatprep.subr.mxu0 0.0
    %86 = vmatpush1.xpose.msra.mxu0 0.0
    %87 = vmatprep.subr.mxu0 0.0
    %88 = vmatpush1.xpose.msra.mxu0 0.0
    %89 = vmatprep.subr.mxu0 0.0
    %90 = vmatpush1.xpose.msra.mxu0 0.0
    %91 = vmatprep.subr.mxu0 0.0
    %92 = vmatpush1.xpose.msra.mxu0 0.0
    %93 = vmatprep.subr.mxu0 0.0
    %94 = vmatpush1.xpose.msra.mxu0 0.0
    %95 = vmatprep.subr.mxu0 0.0
    %96 = vmatpush1.xpose.msra.mxu0 0.0
    %97 = vmatprep.subr.mxu0 0.0
    %98 = vmatpush1.xpose.msra.mxu0 0.0
    %99 = vmatprep.subr.mxu0 0.0
    %100 = vmatpush1.xpose.msra.mxu0 0.0
    %101 = vmatprep.subr.mxu0 0.0
    %102 = vmatpush1.xpose.msra.mxu0 0.0
    %103 = vmatprep.subr.mxu0 0.0
    %104 = vmatpush1.xpose.msra.mxu0 0.0
    %105 = vmatprep.subr.mxu0 0.0
    %106 = vmatpush1.xpose.msra.mxu0 0.0
    %107 = vmatprep.mubr.f32.mxu0 0.0
    %108 = vmatmul.mubr.f32.gmra.mrb[0].mxu0 %v33
    %v109 = vpop.f32.mrb[0].mxu0
    %v110 = vadd.f32 0.0, %v109
    %v111 = vpop.f32.mrb[0].mxu0
    %112 = vmatprep.mubr.f32.mxu0 0.0
    %113 = vmatmul.mubr.f32.gmra.mrb[0].mxu0 %v34
    %v114 = vpop.f32.mrb[0].mxu0
    %v115 = vadd.f32 0.0, %v114
    %v116 = vpop.f32.mrb[0].mxu0
    %117 = vdwg.mxu0
    %v119 = vlaneseq
    %v120 = vshrl.u32 %v119, 7
    %v121 = vsub.s32 0, %v120
    %v122 = vrot.slane %v35, %v121
    %v124 = vadd.f32 %v40, %v122
    %v125 = vadd.f32 %v42, %v122
    %v126 = vmul.f32 %v110, 2.0
    %v127 = vmul.f32 %v115, 2.0
    %v128 = vsub.f32 %v124, %v126
    %v129 = vsub.f32 %v125, %v127
    %v130 = vmax.f32 %v128, 0.0
    %v131 = vmax.f32 %v129, 0.0
    %v132 = vlaneseq
    %v133 = vshrl.u32 %v132, 7
    %v134 = vadd.s32 %v133, 8
    %v135 = vstv %s29
    %v136 = vadd.s32 %v135, %v133
    %v137 = vadd.s32 %v135, %v134
    %v138 = vlaneseq
    %v139 = vand.u32 %v138, 127
    %vm140 = vcmp.eq.s32.totalorder %v136, %v139
    %vm141 = vcmp.eq.s32.totalorder %v137, %v139
    %v142 = vsel %vm140, 0.0, %v130
    %v143 = vsel %vm141, 0.0, %v131
    %v144 = vlaneseq
    %v145 = vshrl.u32 %v144, 7
    %v146 = vsub.s32 0, %v145
    %v147 = vrot.slane %v36, %v146
    %v148 = vsel %vm140, %v147, 0
    %v149 = vsel %vm141, %v147, 0
    %vm150 = vcmask 130048
    %v151 = vsel %vm150, %v148, 0
    %v152 = vand.u32 %v151, 65535
    %v153 = vshrl.u32 %v151, 16
    %v154 = vcvt.s32.f32 %v152
    %v155 = vcvt.s32.f32 %v153
    %156 = vadd.xlane.f32.xlu0 %v154
    %v157 = vpop.xlane.xlu0 %156
    %158 = vadd.xlane.f32.xlu0 %v155
    %v159 = vpop.xlane.xlu0 %158
    %v160 = vcvt.f32.s32 %v157
    %v161 = vcvt.f32.s32 %v159
    %v162 = vshll.u32 %v161, 16
    %v163 = vadd.s32 %v162, %v160
    %v164 = vsel %vm150, %v149, 0
    %v165 = vand.u32 %v164, 65535
    %v166 = vshrl.u32 %v164, 16
    %v167 = vcvt.s32.f32 %v165
    %v168 = vcvt.s32.f32 %v166
    %169 = vadd.xlane.f32.xlu0 %v167
    %v170 = vpop.xlane.xlu0 %169
    %171 = vadd.xlane.f32.xlu0 %v168
    %v172 = vpop.xlane.xlu0 %171
    %v173 = vcvt.f32.s32 %v170
    %v174 = vcvt.f32.s32 %v172
    %v175 = vshll.u32 %v174, 16
    %v176 = vadd.s32 %v175, %v173
    %vm177 = vcmp.lt.s32.totalorder %v139, 16
    %vm178 = vcmp.lt.s32.totalorder %v136, 16
    %vm179 = vcmp.lt.s32.totalorder %v137, 16
    %vm180 = vcmp.eq.s32.totalorder %v163, %v147
    %vm181 = vcmp.eq.s32.totalorder %v176, %v147
    %vm182 = vmand %vm180, %vm177
    %vm183 = vmand %vm181, %vm177
    %vm184 = vcmp.ne.s32.totalorder %v163, %v147
    %vm185 = vcmp.ne.s32.totalorder %v176, %v147
    %vm186 = vmand %vm184, %vm177
    %vm187 = vmand %vm185, %vm177
    %v188 = vsel %vm182, 1, 0
    %v189 = vsel %vm183, 1, 0
    %v190 = vsel %vm150, %v188, 0
    %v191 = vand.u32 %v190, 65535
    %v192 = vshrl.u32 %v190, 16
    %v193 = vcvt.s32.f32 %v191
    %v194 = vcvt.s32.f32 %v192
    %195 = vadd.xlane.f32.xlu0 %v193
    %v196 = vpop.xlane.xlu0 %195
    %197 = vadd.xlane.f32.xlu0 %v194
    %v198 = vpop.xlane.xlu0 %197
    %v199 = vcvt.f32.s32 %v196
    %v200 = vcvt.f32.s32 %v198
    %v201 = vshll.u32 %v200, 16
    %v202 = vadd.s32 %v201, %v199
    %v203 = vsel %vm150, %v189, 0
    %v204 = vand.u32 %v203, 65535
    %v205 = vshrl.u32 %v203, 16
    %v206 = vcvt.s32.f32 %v204
    %v207 = vcvt.s32.f32 %v205
    %208 = vadd.xlane.f32.xlu0 %v206
    %v209 = vpop.xlane.xlu0 %208
    %210 = vadd.xlane.f32.xlu0 %v207
    %v211 = vpop.xlane.xlu0 %210
    %v212 = vcvt.f32.s32 %v209
    %v213 = vcvt.f32.s32 %v211
    %v214 = vshll.u32 %v213, 16
    %v215 = vadd.s32 %v214, %v212
    %vm216 = vcmp.gt.f32.partialorder %v142, 0.0
    %vm217 = vcmp.gt.f32.partialorder %v143, 0.0
    %vm218 = vmand %vm182, %vm216
    %vm219 = vmand %vm183, %vm217
    %v220 = vsel %vm218, 1, 0
    %v221 = vsel %vm219, 1, 0
    %v222 = vsel %vm150, %v220, 0
    %v223 = vand.u32 %v222, 65535
    %v224 = vshrl.u32 %v222, 16
    %v225 = vcvt.s32.f32 %v223
    %v226 = vcvt.s32.f32 %v224
    %227 = vadd.xlane.f32.xlu0 %v225
    %v228 = vpop.xlane.xlu0 %227
    %229 = vadd.xlane.f32.xlu0 %v226
    %v230 = vpop.xlane.xlu0 %229
    %v231 = vcvt.f32.s32 %v228
    %v232 = vcvt.f32.s32 %v230
    %v233 = vshll.u32 %v232, 16
    %v234 = vadd.s32 %v233, %v231
    %v235 = vsel %vm150, %v221, 0
    %v236 = vand.u32 %v235, 65535
    %v237 = vshrl.u32 %v235, 16
    %v238 = vcvt.s32.f32 %v236
    %v239 = vcvt.s32.f32 %v237
    %240 = vadd.xlane.f32.xlu0 %v238
    %v241 = vpop.xlane.xlu0 %240
    %242 = vadd.xlane.f32.xlu0 %v239
    %v243 = vpop.xlane.xlu0 %242
    %v244 = vcvt.f32.s32 %v241
    %v245 = vcvt.f32.s32 %v243
    %v246 = vshll.u32 %v245, 16
    %v247 = vadd.s32 %v246, %v244
    %vm248 = vcmp.gt.s32.totalorder %v234, 0
    %vm249 = vcmp.gt.s32.totalorder %v247, 0
    %v250 = vsel %vm218, %v142, 3e+38
    %v251 = vsel %vm219, %v143, 3e+38
    %v252 = vsel %vm150, %v250, inf
    %253 = vmin.xlane.f32.xlu0 %v252
    %v254 = vpop.xlane.xlu0 %253
    %v255 = vsel %vm150, %v251, inf
    %256 = vmin.xlane.f32.xlu0 %v255
    %v257 = vpop.xlane.xlu0 %256
    %v258 = vsel %vm186, %v142, 3e+38
    %v259 = vsel %vm187, %v143, 3e+38
    %v260 = vsel %vm150, %v258, inf
    %261 = vmin.xlane.f32.xlu0 %v260
    %v262 = vpop.xlane.xlu0 %261
    %v263 = vsel %vm150, %v259, inf
    %264 = vmin.xlane.f32.xlu0 %v263
    %v265 = vpop.xlane.xlu0 %264
    %vm266 = vcmp.gt.f32.partialorder %v142, %v254
    %vm267 = vcmp.gt.f32.partialorder %v143, %v257
    %vm268 = vmand %vm186, %vm266
    %vm269 = vmand %vm187, %vm267
    %v270 = vadd.f32 %v254, 0.2
    %v271 = vadd.f32 %v257, 0.2
    %vm272 = vcmp.lt.f32.partialorder %v142, %v270
    %vm273 = vcmp.lt.f32.partialorder %v143, %v271
    %vm274 = vmand %vm268, %vm272
    %vm275 = vmand %vm269, %vm273
    %v276 = vsel %vm274, 1, 0
    %v277 = vsel %vm275, 1, 0
    %v278 = vsel %vm150, %v276, 0
    %v279 = vand.u32 %v278, 65535
    %v280 = vshrl.u32 %v278, 16
    %v281 = vcvt.s32.f32 %v279
    %v282 = vcvt.s32.f32 %v280
    %283 = vadd.xlane.f32.xlu0 %v281
    %v284 = vpop.xlane.xlu0 %283
    %285 = vadd.xlane.f32.xlu0 %v282
    %v286 = vpop.xlane.xlu0 %285
    %v287 = vcvt.f32.s32 %v284
    %v288 = vcvt.f32.s32 %v286
    %v289 = vshll.u32 %v288, 16
    %v290 = vadd.s32 %v289, %v287
    %v291 = vsel %vm150, %v277, 0
    %v292 = vand.u32 %v291, 65535
    %v293 = vshrl.u32 %v291, 16
    %v294 = vcvt.s32.f32 %v292
    %v295 = vcvt.s32.f32 %v293
    %296 = vadd.xlane.f32.xlu0 %v294
    %v297 = vpop.xlane.xlu0 %296
    %298 = vadd.xlane.f32.xlu0 %v295
    %v299 = vpop.xlane.xlu0 %298
    %v300 = vcvt.f32.s32 %v297
    %v301 = vcvt.f32.s32 %v299
    %v302 = vshll.u32 %v301, 16
    %v303 = vadd.s32 %v302, %v300
    %v304 = vsel %vm274, %v139, 16
    %v305 = vsel %vm275, %v139, 16
    %v306 = vsel %vm150, %v304, 2147483647
    %v307 = vand.u32 %v306, 65535
    %v308 = vshra.s32 %v306, 16
    %v309 = vcvt.s32.f32 %v307
    %v310 = vcvt.s32.f32 %v308
    %311 = vmin.xlane.f32.xlu0 %v310
    %v312 = vpop.xlane.xlu0 %311
    %vm313 = vcmp.eq.f32.partialorder %v310, %v312
    %v314 = vsel %vm313, %v309, inf
    %315 = vmin.xlane.f32.xlu0 %v314
    %v316 = vpop.xlane.xlu0 %315
    %v317 = vcvt.f32.s32 %v316
    %v318 = vcvt.f32.s32 %v312
    %v319 = vshll.u32 %v318, 16
    %v320 = vadd.s32 %v319, %v317
    %v321 = vsel %vm150, %v305, 2147483647
    %v322 = vand.u32 %v321, 65535
    %v323 = vshra.s32 %v321, 16
    %v324 = vcvt.s32.f32 %v322
    %v325 = vcvt.s32.f32 %v323
    %326 = vmin.xlane.f32.xlu0 %v325
    %v327 = vpop.xlane.xlu0 %326
    %vm328 = vcmp.eq.f32.partialorder %v325, %v327
    %v329 = vsel %vm328, %v324, inf
    %330 = vmin.xlane.f32.xlu0 %v329
    %v331 = vpop.xlane.xlu0 %330
    %v332 = vcvt.f32.s32 %v331
    %v333 = vcvt.f32.s32 %v327
    %v334 = vshll.u32 %v333, 16
    %v335 = vadd.s32 %v334, %v332
    %vm336 = vcmp.lt.s32.totalorder %v139, %v320
    %vm337 = vcmp.lt.s32.totalorder %v139, %v335
    %vm338 = vmand %vm186, %vm336
    %vm339 = vmand %vm187, %vm337
    %v340 = vsel %vm338, 1, 0
    %v341 = vsel %vm339, 1, 0
    %v342 = vsel %vm150, %v340, 0
    %v343 = vand.u32 %v342, 65535
    %v344 = vshrl.u32 %v342, 16
    %v345 = vcvt.s32.f32 %v343
    %v346 = vcvt.s32.f32 %v344
    %347 = vadd.xlane.f32.xlu0 %v345
    %v348 = vpop.xlane.xlu0 %347
    %349 = vadd.xlane.f32.xlu0 %v346
    %v350 = vpop.xlane.xlu0 %349
    %v351 = vcvt.f32.s32 %v348
    %v352 = vcvt.f32.s32 %v350
    %v353 = vshll.u32 %v352, 16
    %v354 = vadd.s32 %v353, %v351
    %v355 = vsel %vm150, %v341, 0
    %v356 = vand.u32 %v355, 65535
    %v357 = vshrl.u32 %v355, 16
    %v358 = vcvt.s32.f32 %v356
    %v359 = vcvt.s32.f32 %v357
    %360 = vadd.xlane.f32.xlu0 %v358
    %v361 = vpop.xlane.xlu0 %360
    %362 = vadd.xlane.f32.xlu0 %v359
    %v363 = vpop.xlane.xlu0 %362
    %v364 = vcvt.f32.s32 %v361
    %v365 = vcvt.f32.s32 %v363
    %v366 = vshll.u32 %v365, 16
    %v367 = vadd.s32 %v366, %v364
    %vm368 = vcmp.eq.s32.totalorder %v139, %v354
    %vm369 = vcmp.eq.s32.totalorder %v139, %v367
    %v370 = vsel %vm368, %v142, 0.0
    %v371 = vsel %vm369, %v143, 0.0
    %v372 = vsel %vm150, %v370, 0.0
    %373 = vadd.xlane.f32.xlu0 %v372
    %v374 = vpop.xlane.xlu0 %373
    %v375 = vsel %vm150, %v371, 0.0
    %376 = vadd.xlane.f32.xlu0 %v375
    %v377 = vpop.xlane.xlu0 %376
    %vm378 = vcmp.gt.s32.totalorder %v290, 0
    %vm379 = vcmp.gt.s32.totalorder %v303, 0
    %v380 = vsel %vm378, %v374, %v262
    %v381 = vsel %vm379, %v377, %v265
    %vm382 = vcmp.ge.s32.totalorder %v202, 2
    %vm383 = vcmp.ge.s32.totalorder %v215, 2
    %vm384 = vmand %vm178, %vm382
    %vm385 = vmand %vm179, %vm383
    %vm386 = vmand %vm384, %vm248
    %vm387 = vmand %vm385, %vm249
    %v388 = vsub.f32 %v254, %v380
    %v389 = vsub.f32 %v257, %v381
    %v390 = vadd.f32 %v388, 0.2
    %v391 = vadd.f32 %v389, 0.2
    %v392 = vmax.f32 %v390, 0.0
    %v393 = vmax.f32 %v391, 0.0
    %v394 = vsel %vm386, %v392, 0.0
    %v395 = vsel %vm387, %v393, 0.0
    %vm396 = vcmask 7168
    %v397 = vsel %vm396, %v394, 0.0
    %v398 = vsel %vm396, %v395, 0.0
    %v399 = vadd.f32 %v397, %v398
    %400 = vadd.xlane.f32.xlu0 %v399
    %v401 = vpop.xlane.xlu0 %400
    %v402 = vrot.slane %v401, 4
    %v403 = vadd.f32 %v401, %v402
    %v404 = vrot.slane %v403, 2
    %v405 = vadd.f32 %v403, %v404
    %v406 = vrot.slane %v405, 1
    %v407 = vadd.f32 %v405, %v406
    %s408 = vtos %v407
    %v409 = vsel %vm386, 1.0, 0.0
    %v410 = vsel %vm387, 1.0, 0.0
    %v411 = vsel %vm396, %v409, 0.0
    %v412 = vsel %vm396, %v410, 0.0
    %v413 = vadd.f32 %v411, %v412
    %414 = vadd.xlane.f32.xlu0 %v413
    %v415 = vpop.xlane.xlu0 %414
    %v416 = vrot.slane %v415, 4
    %v417 = vadd.f32 %v415, %v416
    %v418 = vrot.slane %v417, 2
    %v419 = vadd.f32 %v417, %v418
    %v420 = vrot.slane %v419, 1
    %v421 = vadd.f32 %v419, %v420
    %s422 = vtos %v421
    %vm423 = vcmp.eq.s32.totalorder %v139, 0
    %vm424 = vcmp.eq.s32.totalorder %v139, 1
    %v425 = vstv %s422
    %v426 = vsel %vm424, %v425, 0.0
    %v427 = vstv %s408
    %v428 = vsel %vm423, %v427, %v426
    %429 = vst [vmem:[#allocation5] sm:$0x1] %v428
    // Predicated region
    $region18: #{tpu_custom_call.1} parent=1 // pred_check
      _
    $region19: #{tpu_custom_call.1} parent=1 // pred_check_branch
      %431 = sbr.rel (0) target = $region21
    $region20: #{tpu_custom_call.1} parent=1 // pred_region
      %s433 = ssub.s32 16, 16
      %434 = vsyncadd [#allocation4], %s433
      %s436 = sshll.u32 [#allocation5], 4
      %s437 = int_to_ptr.vmem [resolvable:$true] %s436
      %439 = dma.vmem_to_hbm [thread:$0]  %s437, 16, %s3, [#allocation4]
    $region21: #{tpu_custom_call.1} parent=1 // pred_fallthru
      _
    // Predicated region
    $region22: #{tpu_custom_call.1} parent=1 // pred_check
      _
    $region23: #{tpu_custom_call.1} parent=1 // pred_check_branch
      %441 = sbr.rel (0) target = $region25
    $region24: #{tpu_custom_call.1} parent=1 // pred_region
      %442 = dma.done [#allocation4], 16
    $region25: #{tpu_custom_call.1} parent=1 // pred_fallthru
      _
    %443 = vsyncpa [#allocation3], 1
    %444 = vsyncpa [#allocation4], 1

</llo_original>
